<compile_context>
chip_gen: v6e
topology: v6e:2x2x1
jax: 0.10.0
libtpu: 0.0.40
codegen_flags: <defaults>
</compile_context>

<pallas_src>
from functools import partial

import numpy as np
import jax
import jax.numpy as jnp
from jax.experimental import pallas as pl
from jax.experimental.pallas import tpu as pltpu


def resblock_kernel(x_ref, m_ref, w1_ref, b1_ref, w2_ref, b2_ref, o_ref,
                    *, H, W, C, res_scale):
    HW = H * W
    x = x_ref[...]          # (C, HW) f32, lanes = flattened pixels
    masks = m_ref[...]      # (9, HW) f32, 1.0 = in-image tap, 0.0 = zero pad

    def conv3x3(a, w_ref, b_ref):
        # Build the (9C, HW) im2col patch with lane rolls: tap (dy, dx) at
        # pixel (y, xp) is a[:, (y+dy)*W + (xp+dx)], i.e. a static lane shift
        # by dy*W + dx with out-of-image (wrapped) lanes zeroed by the mask.
        taps = []
        for dy in (-1, 0, 1):
            for dx in (-1, 0, 1):
                off = dy * W + dx
                if off == 0:
                    taps.append(a)                       # center tap, no mask
                else:
                    t = pltpu.roll(a, shift=(-off) % HW, axis=1)
                    row = (dy + 1) * 3 + (dx + 1)
                    taps.append(t * masks[row:row + 1, :])
        patch = jnp.concatenate(taps, axis=0).astype(jnp.bfloat16)   # (9C, HW)
        # Single MXU matmul, bf16 operands, f32 accumulation; lane dim = HW.
        acc = jnp.dot(w_ref[...], patch,
                      preferred_element_type=jnp.float32)            # (C, HW)
        return acc + b_ref[...]                                      # + (C, 1)

    # body: conv -> ReLU -> conv   (elementwise math stays f32)
    h = jnp.maximum(conv3x3(x, w1_ref, b1_ref), 0.0)
    res = conv3x3(h, w2_ref, b2_ref)

    if res_scale != 1.0:      # static Python check: skip full-slab multiply
        res = res * res_scale
    o_ref[...] = (res + x).astype(o_ref.dtype)


def _tap_masks(H, W):
    """(9, H*W) f32 validity masks for the 3x3 taps (SAME zero padding)."""
    HW = H * W
    yy, xx = np.meshgrid(np.arange(H), np.arange(W), indexing="ij")
    yy = yy.reshape(1, HW)
    xx = xx.reshape(1, HW)
    rows = []
    for dy in (-1, 0, 1):
        for dx in (-1, 0, 1):
            valid = ((yy + dy >= 0) & (yy + dy < H) &
                     (xx + dx >= 0) & (xx + dx < W))
            rows.append(valid.astype(np.float32))
    return jnp.asarray(np.concatenate(rows, axis=0))


def resblock_forward(x, params, res_scale=1.0):
    """x: (B, C, H, W) float32, NCHW (same layout as the PyTorch module)."""
    B, C, H, W = x.shape
    HW = H * W

    # Free row-major view: row b*C + c holds channel c of image b over pixels.
    x2 = x.reshape(B * C, HW)

    # OIHW (C, C, 3, 3) -> im2col matrix (C_out, 9*C_in), row order
    # (dy-major, dx, c_in) matching the kernel's patch rows; bf16 once.
    def to_mat(w):
        return jnp.transpose(w, (0, 2, 3, 1)).reshape(C, 9 * C).astype(jnp.bfloat16)

    w1 = to_mat(params["w1"])
    w2 = to_mat(params["w2"])
    b1 = params["b1"].reshape(C, 1).astype(jnp.float32)
    b2 = params["b2"].reshape(C, 1).astype(jnp.float32)
    tap_masks = _tap_masks(H, W)                       # (9, HW) f32 constant

    kernel = partial(resblock_kernel, H=H, W=W, C=C,
                     res_scale=float(res_scale))

    flops = B * 2 * (2 * HW * (9 * C) * C)             # two convs, 2*M*N*K
    bytes_accessed = (2 * B * C * HW * 4               # x in + out (f32)
                      + 2 * 9 * C * C * 2              # bf16 weights
                      + 2 * C * 4 + 9 * HW * 4)        # biases + masks

    out = pl.pallas_call(
        kernel,
        out_shape=jax.ShapeDtypeStruct((B * C, HW), x.dtype),
        grid=(B,),
        in_specs=[
            pl.BlockSpec((C, HW), lambda b: (b, 0)),        # x  (lane-dense)
            pl.BlockSpec((9, HW), lambda b: (0, 0)),        # tap masks
            pl.BlockSpec((C, 9 * C), lambda b: (0, 0)),     # conv1 weight bf16
            pl.BlockSpec((C, 1), lambda b: (0, 0)),         # conv1 bias
            pl.BlockSpec((C, 9 * C), lambda b: (0, 0)),     # conv2 weight bf16
            pl.BlockSpec((C, 1), lambda b: (0, 0)),         # conv2 bias
        ],
        out_specs=pl.BlockSpec((C, HW), lambda b: (b, 0)),  # lane-dense store
        compiler_params=pltpu.CompilerParams(
            dimension_semantics=("parallel",),
            vmem_limit_bytes=32 * 1024 * 1024,
        ),
        cost_estimate=pl.CostEstimate(
            flops=flops, transcendentals=0, bytes_accessed=bytes_accessed),
    )(x2, tap_masks, w1, b1, w2, b2)

    return out.reshape(B, C, H, W)


def resblock_reference(x, p, res_scale=1.0):
    """Pure-JAX (f32) reference mirroring the PyTorch forward, NCHW."""
    dn = ("NCHW", "OIHW", "NCHW")
    h = jax.lax.conv_general_dilated(x, p["w1"], (1, 1), "SAME",
                                     dimension_numbers=dn)
    h = h + p["b1"].reshape(1, -1, 1, 1)
    h = jnp.maximum(h, 0.0)
    r = jax.lax.conv_general_dilated(h, p["w2"], (1, 1), "SAME",
                                     dimension_numbers=dn)
    r = r + p["b2"].reshape(1, -1, 1, 1)
    return r * res_scale + x


def init_params(key, n_feat, kernel_size):
    ks = jax.random.split(key, 4)
    scale = 0.1
    return {
        # conv weights in OIHW layout, matching nn.Conv2d
        "w1": scale * jax.random.normal(
            ks[0], (n_feat, n_feat, kernel_size, kernel_size), jnp.float32),
        "b1": scale * jax.random.normal(ks[1], (n_feat,), jnp.float32),
        "w2": scale * jax.random.normal(
            ks[2], (n_feat, n_feat, kernel_size, kernel_size), jnp.float32),
        "b2": scale * jax.random.normal(ks[3], (n_feat,), jnp.float32),
    }


if __name__ == "__main__":
    B, C, H, W = 2, 16, 16, 16       # n_feats = 16
    kernel_size = 3
    res_scale = 1.0

    key = jax.random.PRNGKey(0)
    k_x, k_p = jax.random.split(key)
    x = jax.random.normal(k_x, (B, C, H, W), jnp.float32)   # NCHW like PyTorch
    params = init_params(k_p, C, kernel_size)

    run = jax.jit(resblock_forward, static_argnums=2)
    out = run(x, params, res_scale)
    out = jax.block_until_ready(out)

    ref = resblock_reference(x, params, res_scale)
    # Tolerance sized for bf16 MXU operands (two chained convs) vs f32 reference.
    if not jnp.allclose(out, ref, atol=3e-2, rtol=3e-2):
        raise AssertionError("Pallas ResBlock output mismatch vs JAX reference")

    print("KERNEL_OK")
</pallas_src>

<mosaic_0001>
module attributes {stable_mosaic.version = 11 : i64} {
  func.func @resblock_kernel(%arg0: i32, %arg1: memref<16x256xf32, #tpu.memory_space<vmem>>, %arg2: memref<9x256xf32, #tpu.memory_space<vmem>>, %arg3: memref<16x144xbf16, #tpu.memory_space<vmem>>, %arg4: memref<16x1xf32, #tpu.memory_space<vmem>>, %arg5: memref<16x144xbf16, #tpu.memory_space<vmem>>, %arg6: memref<16x1xf32, #tpu.memory_space<vmem>>, %arg7: memref<16x256xf32, #tpu.memory_space<vmem>>) attributes {dimension_semantics = [#tpu.dimension_semantics<parallel>], iteration_bounds = array<i64: 2>, scalar_prefetch = 0 : i64, scratch_operands = 0 : i64, tpu.core_type = #tpu.core_type<tc>, window_params = [{transform_indices = @transform_0, window_bounds = array<i64: 16, 256>}, {pipeline_mode = #tpu.pipeline_mode<synchronous>, transform_indices = @transform_1, window_bounds = array<i64: 9, 256>}, {pipeline_mode = #tpu.pipeline_mode<synchronous>, transform_indices = @transform_2, window_bounds = array<i64: 16, 144>}, {pipeline_mode = #tpu.pipeline_mode<synchronous>, transform_indices = @transform_3, window_bounds = array<i64: 16, 1>}, {pipeline_mode = #tpu.pipeline_mode<synchronous>, transform_indices = @transform_4, window_bounds = array<i64: 16, 144>}, {pipeline_mode = #tpu.pipeline_mode<synchronous>, transform_indices = @transform_5, window_bounds = array<i64: 16, 1>}, {transform_indices = @transform_6, window_bounds = array<i64: 16, 256>}]} {
    %c0 = arith.constant 0 : index
    %c0_0 = arith.constant 0 : index
    %0 = vector.load %arg1[%c0, %c0_0] : memref<16x256xf32, #tpu.memory_space<vmem>>, vector<16x256xf32>
    %c0_1 = arith.constant 0 : index
    %c0_2 = arith.constant 0 : index
    %1 = vector.load %arg2[%c0_1, %c0_2] : memref<9x256xf32, #tpu.memory_space<vmem>>, vector<9x256xf32>
    %c17_i32 = arith.constant 17 : i32
    %2 = tpu.dynamic_rotate %0 by %c17_i32 dim 1 : vector<16x256xf32>, i32 -> vector<16x256xf32>
    %3 = vector.extract_strided_slice %1 {offsets = [0, 0], sizes = [1, 256], strides = [1, 1]} : vector<9x256xf32> to vector<1x256xf32>
    %4 = vector.broadcast %3 : vector<1x256xf32> to vector<16x256xf32>
    %5 = arith.mulf %2, %4 : vector<16x256xf32>
    %c16_i32 = arith.constant 16 : i32
    %6 = tpu.dynamic_rotate %0 by %c16_i32 dim 1 : vector<16x256xf32>, i32 -> vector<16x256xf32>
    %7 = vector.extract_strided_slice %1 {offsets = [1, 0], sizes = [1, 256], strides = [1, 1]} : vector<9x256xf32> to vector<1x256xf32>
    %8 = vector.broadcast %7 : vector<1x256xf32> to vector<16x256xf32>
    %9 = arith.mulf %6, %8 : vector<16x256xf32>
    %c15_i32 = arith.constant 15 : i32
    %10 = tpu.dynamic_rotate %0 by %c15_i32 dim 1 : vector<16x256xf32>, i32 -> vector<16x256xf32>
    %11 = vector.extract_strided_slice %1 {offsets = [2, 0], sizes = [1, 256], strides = [1, 1]} : vector<9x256xf32> to vector<1x256xf32>
    %12 = vector.broadcast %11 : vector<1x256xf32> to vector<16x256xf32>
    %13 = arith.mulf %10, %12 : vector<16x256xf32>
    %c1_i32 = arith.constant 1 : i32
    %14 = tpu.dynamic_rotate %0 by %c1_i32 dim 1 : vector<16x256xf32>, i32 -> vector<16x256xf32>
    %15 = vector.extract_strided_slice %1 {offsets = [3, 0], sizes = [1, 256], strides = [1, 1]} : vector<9x256xf32> to vector<1x256xf32>
    %16 = vector.broadcast %15 : vector<1x256xf32> to vector<16x256xf32>
    %17 = arith.mulf %14, %16 : vector<16x256xf32>
    %c255_i32 = arith.constant 255 : i32
    %18 = tpu.dynamic_rotate %0 by %c255_i32 dim 1 : vector<16x256xf32>, i32 -> vector<16x256xf32>
    %19 = vector.extract_strided_slice %1 {offsets = [5, 0], sizes = [1, 256], strides = [1, 1]} : vector<9x256xf32> to vector<1x256xf32>
    %20 = vector.broadcast %19 : vector<1x256xf32> to vector<16x256xf32>
    %21 = arith.mulf %18, %20 : vector<16x256xf32>
    %c241_i32 = arith.constant 241 : i32
    %22 = tpu.dynamic_rotate %0 by %c241_i32 dim 1 : vector<16x256xf32>, i32 -> vector<16x256xf32>
    %23 = vector.extract_strided_slice %1 {offsets = [6, 0], sizes = [1, 256], strides = [1, 1]} : vector<9x256xf32> to vector<1x256xf32>
    %24 = vector.broadcast %23 : vector<1x256xf32> to vector<16x256xf32>
    %25 = arith.mulf %22, %24 : vector<16x256xf32>
    %c240_i32 = arith.constant 240 : i32
    %26 = tpu.dynamic_rotate %0 by %c240_i32 dim 1 : vector<16x256xf32>, i32 -> vector<16x256xf32>
    %27 = vector.extract_strided_slice %1 {offsets = [7, 0], sizes = [1, 256], strides = [1, 1]} : vector<9x256xf32> to vector<1x256xf32>
    %28 = vector.broadcast %27 : vector<1x256xf32> to vector<16x256xf32>
    %29 = arith.mulf %26, %28 : vector<16x256xf32>
    %c239_i32 = arith.constant 239 : i32
    %30 = tpu.dynamic_rotate %0 by %c239_i32 dim 1 : vector<16x256xf32>, i32 -> vector<16x256xf32>
    %31 = vector.extract_strided_slice %1 {offsets = [8, 0], sizes = [1, 256], strides = [1, 1]} : vector<9x256xf32> to vector<1x256xf32>
    %32 = vector.broadcast %31 : vector<1x256xf32> to vector<16x256xf32>
    %33 = arith.mulf %30, %32 : vector<16x256xf32>
    %34 = tpu.concatenate %5, %9, %13, %17, %0, %21, %25, %29, %33 in 0 : vector<16x256xf32>, vector<16x256xf32>, vector<16x256xf32>, vector<16x256xf32>, vector<16x256xf32>, vector<16x256xf32>, vector<16x256xf32>, vector<16x256xf32>, vector<16x256xf32> -> vector<144x256xf32>
    %35 = arith.truncf %34 : vector<144x256xf32> to vector<144x256xbf16>
    %c0_3 = arith.constant 0 : index
    %c0_4 = arith.constant 0 : index
    %36 = vector.load %arg3[%c0_3, %c0_4] : memref<16x144xbf16, #tpu.memory_space<vmem>>, vector<16x144xbf16>
    %cst = arith.constant dense<0.000000e+00> : vector<16x256xf32>
    %37 = tpu.matmul %36, %35, %cst {dimension_numbers = #tpu.dot_dimension_numbers<[1], [0], [0], [1], [0, 0, 1, 1], [], []>} : vector<16x144xbf16>, vector<144x256xbf16>, vector<16x256xf32> -> vector<16x256xf32>
    %c0_5 = arith.constant 0 : index
    %c0_6 = arith.constant 0 : index
    %38 = vector.load %arg4[%c0_5, %c0_6] : memref<16x1xf32, #tpu.memory_space<vmem>>, vector<16x1xf32>
    %39 = vector.broadcast %38 : vector<16x1xf32> to vector<16x256xf32>
    %40 = arith.addf %37, %39 : vector<16x256xf32>
    %cst_7 = arith.constant 0.000000e+00 : f32
    %41 = vector.broadcast %cst_7 : f32 to vector<16x256xf32>
    %42 = arith.maximumf %40, %41 : vector<16x256xf32>
    %c17_i32_8 = arith.constant 17 : i32
    %43 = tpu.dynamic_rotate %42 by %c17_i32_8 dim 1 : vector<16x256xf32>, i32 -> vector<16x256xf32>
    %44 = vector.extract_strided_slice %1 {offsets = [0, 0], sizes = [1, 256], strides = [1, 1]} : vector<9x256xf32> to vector<1x256xf32>
    %45 = vector.broadcast %44 : vector<1x256xf32> to vector<16x256xf32>
    %46 = arith.mulf %43, %45 : vector<16x256xf32>
    %c16_i32_9 = arith.constant 16 : i32
    %47 = tpu.dynamic_rotate %42 by %c16_i32_9 dim 1 : vector<16x256xf32>, i32 -> vector<16x256xf32>
    %48 = vector.extract_strided_slice %1 {offsets = [1, 0], sizes = [1, 256], strides = [1, 1]} : vector<9x256xf32> to vector<1x256xf32>
    %49 = vector.broadcast %48 : vector<1x256xf32> to vector<16x256xf32>
    %50 = arith.mulf %47, %49 : vector<16x256xf32>
    %c15_i32_10 = arith.constant 15 : i32
    %51 = tpu.dynamic_rotate %42 by %c15_i32_10 dim 1 : vector<16x256xf32>, i32 -> vector<16x256xf32>
    %52 = vector.extract_strided_slice %1 {offsets = [2, 0], sizes = [1, 256], strides = [1, 1]} : vector<9x256xf32> to vector<1x256xf32>
    %53 = vector.broadcast %52 : vector<1x256xf32> to vector<16x256xf32>
    %54 = arith.mulf %51, %53 : vector<16x256xf32>
    %c1_i32_11 = arith.constant 1 : i32
    %55 = tpu.dynamic_rotate %42 by %c1_i32_11 dim 1 : vector<16x256xf32>, i32 -> vector<16x256xf32>
    %56 = vector.extract_strided_slice %1 {offsets = [3, 0], sizes = [1, 256], strides = [1, 1]} : vector<9x256xf32> to vector<1x256xf32>
    %57 = vector.broadcast %56 : vector<1x256xf32> to vector<16x256xf32>
    %58 = arith.mulf %55, %57 : vector<16x256xf32>
    %c255_i32_12 = arith.constant 255 : i32
    %59 = tpu.dynamic_rotate %42 by %c255_i32_12 dim 1 : vector<16x256xf32>, i32 -> vector<16x256xf32>
    %60 = vector.extract_strided_slice %1 {offsets = [5, 0], sizes = [1, 256], strides = [1, 1]} : vector<9x256xf32> to vector<1x256xf32>
    %61 = vector.broadcast %60 : vector<1x256xf32> to vector<16x256xf32>
    %62 = arith.mulf %59, %61 : vector<16x256xf32>
    %c241_i32_13 = arith.constant 241 : i32
    %63 = tpu.dynamic_rotate %42 by %c241_i32_13 dim 1 : vector<16x256xf32>, i32 -> vector<16x256xf32>
    %64 = vector.extract_strided_slice %1 {offsets = [6, 0], sizes = [1, 256], strides = [1, 1]} : vector<9x256xf32> to vector<1x256xf32>
    %65 = vector.broadcast %64 : vector<1x256xf32> to vector<16x256xf32>
    %66 = arith.mulf %63, %65 : vector<16x256xf32>
    %c240_i32_14 = arith.constant 240 : i32
    %67 = tpu.dynamic_rotate %42 by %c240_i32_14 dim 1 : vector<16x256xf32>, i32 -> vector<16x256xf32>
    %68 = vector.extract_strided_slice %1 {offsets = [7, 0], sizes = [1, 256], strides = [1, 1]} : vector<9x256xf32> to vector<1x256xf32>
    %69 = vector.broadcast %68 : vector<1x256xf32> to vector<16x256xf32>
    %70 = arith.mulf %67, %69 : vector<16x256xf32>
    %c239_i32_15 = arith.constant 239 : i32
    %71 = tpu.dynamic_rotate %42 by %c239_i32_15 dim 1 : vector<16x256xf32>, i32 -> vector<16x256xf32>
    %72 = vector.extract_strided_slice %1 {offsets = [8, 0], sizes = [1, 256], strides = [1, 1]} : vector<9x256xf32> to vector<1x256xf32>
    %73 = vector.broadcast %72 : vector<1x256xf32> to vector<16x256xf32>
    %74 = arith.mulf %71, %73 : vector<16x256xf32>
    %75 = tpu.concatenate %46, %50, %54, %58, %42, %62, %66, %70, %74 in 0 : vector<16x256xf32>, vector<16x256xf32>, vector<16x256xf32>, vector<16x256xf32>, vector<16x256xf32>, vector<16x256xf32>, vector<16x256xf32>, vector<16x256xf32>, vector<16x256xf32> -> vector<144x256xf32>
    %76 = arith.truncf %75 : vector<144x256xf32> to vector<144x256xbf16>
    %c0_16 = arith.constant 0 : index
    %c0_17 = arith.constant 0 : index
    %77 = vector.load %arg5[%c0_16, %c0_17] : memref<16x144xbf16, #tpu.memory_space<vmem>>, vector<16x144xbf16>
    %cst_18 = arith.constant dense<0.000000e+00> : vector<16x256xf32>
    %78 = tpu.matmul %77, %76, %cst_18 {dimension_numbers = #tpu.dot_dimension_numbers<[1], [0], [0], [1], [0, 0, 1, 1], [], []>} : vector<16x144xbf16>, vector<144x256xbf16>, vector<16x256xf32> -> vector<16x256xf32>
    %c0_19 = arith.constant 0 : index
    %c0_20 = arith.constant 0 : index
    %79 = vector.load %arg6[%c0_19, %c0_20] : memref<16x1xf32, #tpu.memory_space<vmem>>, vector<16x1xf32>
    %80 = vector.broadcast %79 : vector<16x1xf32> to vector<16x256xf32>
    %81 = arith.addf %78, %80 : vector<16x256xf32>
    %82 = arith.addf %81, %0 : vector<16x256xf32>
    %c0_21 = arith.constant 0 : index
    %c0_22 = arith.constant 0 : index
    %83 = vector.load %arg7[%c0_21, %c0_22] : memref<16x256xf32, #tpu.memory_space<vmem>>, vector<16x256xf32>
    tpu.vector_store %arg7[%c0_21, %c0_22], %82 {strides = array<i32>} : memref<16x256xf32, #tpu.memory_space<vmem>>, vector<16x256xf32>,
    return
  }
  func.func @transform_0(%arg0: i32) -> (i32, i32) {
    %c0_i32 = arith.constant 0 : i32
    %c0_i32_0 = arith.constant 0 : i32
    return %arg0, %c0_i32 : i32, i32
  }
  func.func @transform_1(%arg0: i32) -> (i32, i32) {
    %c0_i32 = arith.constant 0 : i32
    %c0_i32_0 = arith.constant 0 : i32
    %c0_i32_1 = arith.constant 0 : i32
    return %c0_i32, %c0_i32_0 : i32, i32
  }
  func.func @transform_2(%arg0: i32) -> (i32, i32) {
    %c0_i32 = arith.constant 0 : i32
    %c0_i32_0 = arith.constant 0 : i32
    %c0_i32_1 = arith.constant 0 : i32
    return %c0_i32, %c0_i32_0 : i32, i32
  }
  func.func @transform_3(%arg0: i32) -> (i32, i32) {
    %c0_i32 = arith.constant 0 : i32
    %c0_i32_0 = arith.constant 0 : i32
    %c0_i32_1 = arith.constant 0 : i32
    return %c0_i32, %c0_i32_0 : i32, i32
  }
  func.func @transform_4(%arg0: i32) -> (i32, i32) {
    %c0_i32 = arith.constant 0 : i32
    %c0_i32_0 = arith.constant 0 : i32
    %c0_i32_1 = arith.constant 0 : i32
    return %c0_i32, %c0_i32_0 : i32, i32
  }
  func.func @transform_5(%arg0: i32) -> (i32, i32) {
    %c0_i32 = arith.constant 0 : i32
    %c0_i32_0 = arith.constant 0 : i32
    %c0_i32_1 = arith.constant 0 : i32
    return %c0_i32, %c0_i32_0 : i32, i32
  }
  func.func @transform_6(%arg0: i32) -> (i32, i32) {
    %c0_i32 = arith.constant 0 : i32
    %c0_i32_0 = arith.constant 0 : i32
    return %arg0, %c0_i32 : i32, i32
  }
}

</mosaic_0001>

<llo_original>
// kernel: resblock_forward.1
$region0: #{resblock_forward.1}
  #allocation0 [shape = 'u32[]', space=smem, size = 0x4, offset = 0x4, fixed_abs, tag = 'smem constant byte address 0x4 - core index']
  #allocation1 [shape = 'u32[144,128]{1,0:T(1,128)}', space=vmem, size = 0x12000, scoped, tag = 'internal scratch']
  %s0 = inlined_call_operand.vmem [shape: f32[32,256], index: 0, kind: input, shape index: {}]
  %s1 = inlined_call_operand.vmem [shape: f32[9,256], index: 1, kind: input, shape index: {}]
  %s2 = inlined_call_operand.vmem [shape: bf16[16,144], index: 2, kind: input, shape index: {}]
  %s3 = inlined_call_operand.vmem [shape: f32[16,1], index: 3, kind: input, shape index: {}]
  %s4 = inlined_call_operand.vmem [shape: bf16[16,144], index: 4, kind: input, shape index: {}]
  %s5 = inlined_call_operand.vmem [shape: f32[16,1], index: 5, kind: input, shape index: {}]
  %s6 = inlined_call_operand.vmem [shape: f32[32,256], index: 6, kind: output, shape index: {}]
  %s7 = sld [smem:[#allocation0]]
  $region57: #{resblock_forward.1} parent=0
    _
  %s9 = ssub.s32 1, %s7
  %s10 = scalar_select 0, %s9, %s7
  loop: start=0, step=1, limit=4
  $region2: #{resblock_forward.1} parent=0 // loop_pre_header
    _
  $region3: #{resblock_forward.1} parent=0 // loop_header
    %s12 = sphi 0, %s16
    %p13 = scmp.ge.s32.totalorder %s12, 4
    %s22 = sphi 0, %s24
    %s25 = sphi 0, %s22
    %s26 = sphi 0, %s25
    %s42 = sphi 0, %s26
    %s46 = sphi 0, %s46
    %s48 = sphi 0, %s46
    %s49 = sphi 0, %s48
    %s63 = sphi 0, %s49
    %s67 = sphi 0, %s67
    %s69 = sphi 0, %s67
    %s70 = sphi 0, %s69
    %s84 = sphi 0, %s70
    %s88 = sphi 0, %s88
    %s90 = sphi 0, %s88
    %s91 = sphi 0, %s90
    %s105 = sphi 0, %s91
    %s109 = sphi 0, %s109
    %s111 = sphi 0, %s109
    %s112 = sphi 0, %s111
    %s126 = sphi 0, %s112
    %s130 = sphi 0, %s130
    %s132 = sphi 0, %s130
    %s133 = sphi 0, %s132
    %s147 = sphi 0, %s133
    %s153 = sphi 0, %s155
    %s156 = sphi 0, %s153
    %s157 = sphi 0, %s156
    %s173 = sphi 0, %s157
  $region4: #{resblock_forward.1} parent=0 // loop_header_branch
    %15 = sbr.rel (%p13) target = $region8
  $region5: #{resblock_forward.1} parent=0 // loop_body
    %s17 = ssub.s32 %s12, 1
    %s18 = ssub.s32 %s12, 2
    %s19 = sadd.s32 %s12, 1
    %s20 = ssub.s32 %s12, %s19
    %p21 = scmp.eq.s32.totalorder %s20, 0
    %s23 = sadd.s32 %s22, 1
    %s24 = scalar_select %p21, %s22, %s23
    %p27 = pneg %p21
    %p28 = scmp.eq.s32.totalorder %s12, 1
    %p29 = por %p27, %p28
    %p30 = scmp.ne.s32.totalorder %s22, %s25
    %p31 = scmp.eq.s32.totalorder %s12, 0
    %p32 = por %p30, %p31
    %p33 = scmp.ne.s32.totalorder %s22, %s25
    %p34 = scmp.eq.s32.totalorder %s17, 1
    %p35 = por %p33, %p34
    %p36 = scmp.ne.s32.totalorder %s25, %s26
    %p37 = scmp.eq.s32.totalorder %s17, 0
    %p38 = por %p36, %p37
    %p39 = scmp.ne.s32.totalorder %s25, %s26
    %p40 = scmp.eq.s32.totalorder %s18, 1
    %p41 = por %p39, %p40
    %p43 = scmp.ne.s32.totalorder %s26, %s42
    %p44 = scmp.eq.s32.totalorder %s18, 0
    %p45 = por %p43, %p44
    %s47 = sadd.s32 %s46, 1
    %p50 = scmp.eq.s32.totalorder %s12, 1
    %p51 = scmp.ne.s32.totalorder %s46, %s48
    %p52 = scmp.eq.s32.totalorder %s12, 0
    %p53 = por %p51, %p52
    %p54 = scmp.ne.s32.totalorder %s46, %s48
    %p55 = scmp.eq.s32.totalorder %s17, 1
    %p56 = por %p54, %p55
    %p57 = scmp.ne.s32.totalorder %s48, %s49
    %p58 = scmp.eq.s32.totalorder %s17, 0
    %p59 = por %p57, %p58
    %p60 = scmp.ne.s32.totalorder %s48, %s49
    %p61 = scmp.eq.s32.totalorder %s18, 1
    %p62 = por %p60, %p61
    %p64 = scmp.ne.s32.totalorder %s49, %s63
    %p65 = scmp.eq.s32.totalorder %s18, 0
    %p66 = por %p64, %p65
    %s68 = sadd.s32 %s67, 1
    %p71 = scmp.eq.s32.totalorder %s12, 1
    %p72 = scmp.ne.s32.totalorder %s67, %s69
    %p73 = scmp.eq.s32.totalorder %s12, 0
    %p74 = por %p72, %p73
    %p75 = scmp.ne.s32.totalorder %s67, %s69
    %p76 = scmp.eq.s32.totalorder %s17, 1
    %p77 = por %p75, %p76
    %p78 = scmp.ne.s32.totalorder %s69, %s70
    %p79 = scmp.eq.s32.totalorder %s17, 0
    %p80 = por %p78, %p79
    %p81 = scmp.ne.s32.totalorder %s69, %s70
    %p82 = scmp.eq.s32.totalorder %s18, 1
    %p83 = por %p81, %p82
    %p85 = scmp.ne.s32.totalorder %s70, %s84
    %p86 = scmp.eq.s32.totalorder %s18, 0
    %p87 = por %p85, %p86
    %s89 = sadd.s32 %s88, 1
    %p92 = scmp.eq.s32.totalorder %s12, 1
    %p93 = scmp.ne.s32.totalorder %s88, %s90
    %p94 = scmp.eq.s32.totalorder %s12, 0
    %p95 = por %p93, %p94
    %p96 = scmp.ne.s32.totalorder %s88, %s90
    %p97 = scmp.eq.s32.totalorder %s17, 1
    %p98 = por %p96, %p97
    %p99 = scmp.ne.s32.totalorder %s90, %s91
    %p100 = scmp.eq.s32.totalorder %s17, 0
    %p101 = por %p99, %p100
    %p102 = scmp.ne.s32.totalorder %s90, %s91
    %p103 = scmp.eq.s32.totalorder %s18, 1
    %p104 = por %p102, %p103
    %p106 = scmp.ne.s32.totalorder %s91, %s105
    %p107 = scmp.eq.s32.totalorder %s18, 0
    %p108 = por %p106, %p107
    %s110 = sadd.s32 %s109, 1
    %p113 = scmp.eq.s32.totalorder %s12, 1
    %p114 = scmp.ne.s32.totalorder %s109, %s111
    %p115 = scmp.eq.s32.totalorder %s12, 0
    %p116 = por %p114, %p115
    %p117 = scmp.ne.s32.totalorder %s109, %s111
    %p118 = scmp.eq.s32.totalorder %s17, 1
    %p119 = por %p117, %p118
    %p120 = scmp.ne.s32.totalorder %s111, %s112
    %p121 = scmp.eq.s32.totalorder %s17, 0
    %p122 = por %p120, %p121
    %p123 = scmp.ne.s32.totalorder %s111, %s112
    %p124 = scmp.eq.s32.totalorder %s18, 1
    %p125 = por %p123, %p124
    %p127 = scmp.ne.s32.totalorder %s112, %s126
    %p128 = scmp.eq.s32.totalorder %s18, 0
    %p129 = por %p127, %p128
    %s131 = sadd.s32 %s130, 1
    %p134 = scmp.eq.s32.totalorder %s12, 1
    %p135 = scmp.ne.s32.totalorder %s130, %s132
    %p136 = scmp.eq.s32.totalorder %s12, 0
    %p137 = por %p135, %p136
    %p138 = scmp.ne.s32.totalorder %s130, %s132
    %p139 = scmp.eq.s32.totalorder %s17, 1
    %p140 = por %p138, %p139
    %p141 = scmp.ne.s32.totalorder %s132, %s133
    %p142 = scmp.eq.s32.totalorder %s17, 0
    %p143 = por %p141, %p142
    %p144 = scmp.ne.s32.totalorder %s132, %s133
    %p145 = scmp.eq.s32.totalorder %s18, 1
    %p146 = por %p144, %p145
    %p148 = scmp.ne.s32.totalorder %s133, %s147
    %p149 = scmp.eq.s32.totalorder %s18, 0
    %p150 = por %p148, %p149
    %s151 = ssub.s32 %s12, %s19
    %p152 = scmp.eq.s32.totalorder %s151, 0
    %s154 = sadd.s32 %s153, 1
    %s155 = scalar_select %p152, %s153, %s154
    %p158 = pneg %p152
    %p159 = scmp.eq.s32.totalorder %s12, 1
    %p160 = por %p158, %p159
    %p161 = scmp.ne.s32.totalorder %s153, %s156
    %p162 = scmp.eq.s32.totalorder %s12, 0
    %p163 = por %p161, %p162
    %p164 = scmp.ne.s32.totalorder %s153, %s156
    %p165 = scmp.eq.s32.totalorder %s17, 1
    %p166 = por %p164, %p165
    %p167 = scmp.ne.s32.totalorder %s156, %s157
    %p168 = scmp.eq.s32.totalorder %s17, 0
    %p169 = por %p167, %p168
    %p170 = scmp.ne.s32.totalorder %s156, %s157
    %p171 = scmp.eq.s32.totalorder %s18, 1
    %p172 = por %p170, %p171
    %p174 = scmp.ne.s32.totalorder %s157, %s173
    %p175 = scmp.eq.s32.totalorder %s18, 0
    %p176 = por %p174, %p175
    %p177 = scmp.le.s32.totalorder 1, %s12
    %p178 = scmp.lt.s32.totalorder %s12, 3
    %p179 = pnand %p177, %p178
    %p180 = pneg %p179
    // Predicated region
    $region9: #{resblock_forward.1} parent=5 // pred_check
      _
    $region10: #{resblock_forward.1} parent=5 // pred_check_branch
      %182 = sbr.rel (%p179) target = $region12
    $region11: #{resblock_forward.1} parent=5 // pred_region
      %s183 = ssub.s32 %s12, 1
      // Predicated region
      $region13: #{resblock_forward.1} parent=11 // pred_check
        %p184 = pneg %p59
      $region14: #{resblock_forward.1} parent=11 // pred_check_branch
        %186 = sbr.rel (%p184) target = $region16
      $region15: #{resblock_forward.1} parent=11 // pred_region
        _
      $region16: #{resblock_forward.1} parent=11 // pred_fallthru
        _
      // Predicated region
      $region17: #{resblock_forward.1} parent=11 // pred_check
        %p187 = pneg %p80
      $region18: #{resblock_forward.1} parent=11 // pred_check_branch
        %189 = sbr.rel (%p187) target = $region20
      $region19: #{resblock_forward.1} parent=11 // pred_region
        _
      $region20: #{resblock_forward.1} parent=11 // pred_fallthru
        _
      // Predicated region
      $region21: #{resblock_forward.1} parent=11 // pred_check
        %p190 = pneg %p101
      $region22: #{resblock_forward.1} parent=11 // pred_check_branch
        %192 = sbr.rel (%p190) target = $region24
      $region23: #{resblock_forward.1} parent=11 // pred_region
        _
      $region24: #{resblock_forward.1} parent=11 // pred_fallthru
        _
      // Predicated region
      $region25: #{resblock_forward.1} parent=11 // pred_check
        %p193 = pneg %p122
      $region26: #{resblock_forward.1} parent=11 // pred_check_branch
        %195 = sbr.rel (%p193) target = $region28
      $region27: #{resblock_forward.1} parent=11 // pred_region
        _
      $region28: #{resblock_forward.1} parent=11 // pred_fallthru
        _
      // Predicated region
      $region29: #{resblock_forward.1} parent=11 // pred_check
        %p196 = pneg %p143
      $region30: #{resblock_forward.1} parent=11 // pred_check_branch
        %198 = sbr.rel (%p196) target = $region32
      $region31: #{resblock_forward.1} parent=11 // pred_region
        _
      $region32: #{resblock_forward.1} parent=11 // pred_fallthru
        _
    $region12: #{resblock_forward.1} parent=5 // pred_fallthru
      _
    %p199 = scmp.lt.s32.totalorder %s12, 2
    // Predicated region
    $region33: #{resblock_forward.1} parent=5 // pred_check
      %p200 = pneg %p199
    $region34: #{resblock_forward.1} parent=5 // pred_check_branch
      %202 = sbr.rel (%p200) target = $region36
    $region35: #{resblock_forward.1} parent=5 // pred_region
      // Predicated region
      $region37: #{resblock_forward.1} parent=35 // pred_check
        %p203 = pneg %p32
      $region38: #{resblock_forward.1} parent=35 // pred_check_branch
        %205 = sbr.rel (%p203) target = $region40
      $region39: #{resblock_forward.1} parent=35 // pred_region
        %s206 = smul.u32 2, %s12
        %p207 = scmp.lt.s32.totalorder %s206, 3
        %s208 = scalar_select %p207, %s206, 3
        %s209 = smul.addr %s208, 2
        %s210 = smul.addr %s209, 8
        %s211 = scalar_lea.vmem %s0, %s210
        %s212 = smul.u32 2, %s12
      $region40: #{resblock_forward.1} parent=35 // pred_fallthru
        _
    $region36: #{resblock_forward.1} parent=5 // pred_fallthru
      _
    %p213 = scmp.le.s32.totalorder 1, %s12
    %p214 = scmp.lt.s32.totalorder %s12, 3
    %p215 = pnand %p213, %p214
    %p216 = pneg %p215
    // Predicated region
    $region41: #{resblock_forward.1} parent=5 // pred_check
      _
    $region42: #{resblock_forward.1} parent=5 // pred_check_branch
      %218 = sbr.rel (%p215) target = $region44
    $region43: #{resblock_forward.1} parent=5 // pred_region
      %s219 = ssub.s32 %s12, 1
      %s220 = smul.u32 2, %s17
      %p221 = scmp.lt.s32.totalorder %s220, 3
      %s222 = scalar_select %p221, %s220, 3
      %s223 = smul.addr %s222, 2
      %s224 = smul.addr %s223, 8
      %s225 = scalar_lea.vmem %s0, %s224
      %p226 = pneg %p38
      %p227 = pneg %p35
      %p228 = pneg %p59
      %p229 = pneg %p56
      %p230 = pneg %p80
      %p231 = pneg %p77
      %p232 = pneg %p101
      %p233 = pneg %p98
      %p234 = pneg %p122
      %p235 = pneg %p119
      %p236 = pneg %p143
      %p237 = pneg %p140
      %p238 = pneg %p169
      %p239 = pneg %p166
      %s240 = smul.u32 2, %s17
      %p241 = scmp.lt.s32.totalorder %s240, 3
      %s242 = scalar_select %p241, %s240, 3
      %s243 = smul.addr %s242, 2
      %s244 = smul.addr %s243, 8
      %s245 = scalar_lea.vmem %s6, %s244
      %s246 = smul.u32 2, %s17
      %p247 = scmp.lt.s32.totalorder %s246, 3
      %s248 = scalar_select %p247, %s246, 3
      %s249 = smul.addr %s248, 2
      %s250 = smul.addr %s249, 8
      %s251 = scalar_lea.vmem %s0, %s250
      %s252 = smul.u32 2, %s17
      %s253 = smul.u32 2, %s17
      %p254 = scmp.lt.s32.totalorder %s253, 3
      %s255 = scalar_select %p254, %s253, 3
      %s256 = smul.addr %s255, 2
      %s257 = smul.addr %s256, 8
      %s258 = scalar_lea.vmem %s6, %s257
      %s259 = smul.u32 2, %s17
      %v261 = vld [vmem:[%s251] sm:$0xff]
      %v262 = vld [vmem:[%s251 + $0x8] sm:$0xff]
      %v263 = vld [vmem:[%s251 + $0x10] sm:$0xff]
      %v264 = vld [vmem:[%s251 + $0x18] sm:$0xff]
      %v265 = vld [vmem:[%s1] sm:$0xff]
      %v266 = vld [vmem:[%s1 + $0x8] sm:$0xff]
      %v267 = vld [vmem:[%s1 + $0x10] sm:$0x1]
      %v268 = vld [vmem:[%s1 + $0x18] sm:$0x1]
      %269 = vrot.lane.b32.xlu0 %v261, 17
      %v270 = vpop.permute.xlu0 %269
      %271 = vrot.lane.b32.xlu0 %v263, 17
      %v272 = vpop.permute.xlu0 %271
      %273 = vrot.lane.b32.xlu0 %v262, 17
      %v274 = vpop.permute.xlu0 %273
      %275 = vrot.lane.b32.xlu0 %v264, 17
      %v276 = vpop.permute.xlu0 %275
      %v277 = vlaneseq
      %v278 = vand.u32 %v277, 127
      %vm279 = vcmp.lt.s32.totalorder %v278, 17
      %v280 = vsel %vm279, %v270, %v274
      %v281 = vsel %vm279, %v272, %v276
      %v282 = vsel %vm279, %v274, %v270
      %v283 = vsel %vm279, %v276, %v272
      %v284 = vlaneseq
      %v285 = vshrl.u32 %v284, 7
      %v286 = vsub.s32 0, %v285
      %v287 = vrot.slane %v265, %v286
      %v288 = vlaneseq
      %v289 = vshrl.u32 %v288, 7
      %v290 = vsub.s32 0, %v289
      %v291 = vrot.slane %v266, %v290
      %v292 = vmul.f32 %v282, %v287
      %v293 = vmul.f32 %v280, %v291
      %v294 = vmul.f32 %v283, %v287
      %v295 = vmul.f32 %v281, %v291
      %296 = vrot.lane.b32.xlu0 %v261, 16
      %v297 = vpop.permute.xlu0 %296
      %298 = vrot.lane.b32.xlu0 %v263, 16
      %v299 = vpop.permute.xlu0 %298
      %300 = vrot.lane.b32.xlu0 %v262, 16
      %v301 = vpop.permute.xlu0 %300
      %302 = vrot.lane.b32.xlu0 %v264, 16
      %v303 = vpop.permute.xlu0 %302
      %vm304 = vcmp.lt.s32.totalorder %v278, 16
      %v305 = vsel %vm304, %v297, %v301
      %v306 = vsel %vm304, %v299, %v303
      %v307 = vsel %vm304, %v301, %v297
      %v308 = vsel %vm304, %v303, %v299
      %v309 = vlaneseq
      %v310 = vshrl.u32 %v309, 7
      %v311 = vsub.s32 1, %v310
      %v312 = vrot.slane %v265, %v311
      %v313 = vlaneseq
      %v314 = vshrl.u32 %v313, 7
      %v315 = vsub.s32 1, %v314
      %v316 = vrot.slane %v266, %v315
      %v317 = vmul.f32 %v307, %v312
      %v318 = vmul.f32 %v305, %v316
      %v319 = vmul.f32 %v308, %v312
      %v320 = vmul.f32 %v306, %v316
      %321 = vrot.lane.b32.xlu0 %v261, 15
      %v322 = vpop.permute.xlu0 %321
      %323 = vrot.lane.b32.xlu0 %v263, 15
      %v324 = vpop.permute.xlu0 %323
      %325 = vrot.lane.b32.xlu0 %v262, 15
      %v326 = vpop.permute.xlu0 %325
      %327 = vrot.lane.b32.xlu0 %v264, 15
      %v328 = vpop.permute.xlu0 %327
      %vm329 = vcmp.lt.s32.totalorder %v278, 15
      %v330 = vsel %vm329, %v322, %v326
      %v331 = vsel %vm329, %v324, %v328
      %v332 = vsel %vm329, %v326, %v322
      %v333 = vsel %vm329, %v328, %v324
      %v334 = vlaneseq
      %v335 = vshrl.u32 %v334, 7
      %v336 = vsub.s32 2, %v335
      %v337 = vrot.slane %v265, %v336
      %v338 = vlaneseq
      %v339 = vshrl.u32 %v338, 7
      %v340 = vsub.s32 2, %v339
      %v341 = vrot.slane %v266, %v340
      %v342 = vmul.f32 %v332, %v337
      %v343 = vmul.f32 %v330, %v341
      %v344 = vmul.f32 %v333, %v337
      %v345 = vmul.f32 %v331, %v341
      %346 = vrot.lane.b32.xlu0 %v261, 1
      %v347 = vpop.permute.xlu0 %346
      %348 = vrot.lane.b32.xlu0 %v263, 1
      %v349 = vpop.permute.xlu0 %348
      %350 = vrot.lane.b32.xlu0 %v262, 1
      %v351 = vpop.permute.xlu0 %350
      %352 = vrot.lane.b32.xlu0 %v264, 1
      %v353 = vpop.permute.xlu0 %352
      %vm354 = vcmp.lt.s32.totalorder %v278, 1
      %v355 = vsel %vm354, %v347, %v351
      %v356 = vsel %vm354, %v349, %v353
      %v357 = vsel %vm354, %v351, %v347
      %v358 = vsel %vm354, %v353, %v349
      %v359 = vlaneseq
      %v360 = vshrl.u32 %v359, 7
      %v361 = vsub.s32 3, %v360
      %v362 = vrot.slane %v265, %v361
      %v363 = vlaneseq
      %v364 = vshrl.u32 %v363, 7
      %v365 = vsub.s32 3, %v364
      %v366 = vrot.slane %v266, %v365
      %v367 = vmul.f32 %v357, %v362
      %v368 = vmul.f32 %v355, %v366
      %v369 = vmul.f32 %v358, %v362
      %v370 = vmul.f32 %v356, %v366
      %371 = vrot.lane.b32.xlu0 %v261, 127
      %v372 = vpop.permute.xlu0 %371
      %373 = vrot.lane.b32.xlu0 %v263, 127
      %v374 = vpop.permute.xlu0 %373
      %375 = vrot.lane.b32.xlu0 %v262, 127
      %v376 = vpop.permute.xlu0 %375
      %377 = vrot.lane.b32.xlu0 %v264, 127
      %v378 = vpop.permute.xlu0 %377
      %vm379 = vcmp.lt.s32.totalorder %v278, 127
      %v380 = vsel %vm379, %v372, %v376
      %v381 = vsel %vm379, %v374, %v378
      %v382 = vsel %vm379, %v376, %v372
      %v383 = vsel %vm379, %v378, %v374
      %v384 = vlaneseq
      %v385 = vshrl.u32 %v384, 7
      %v386 = vsub.s32 5, %v385
      %v387 = vrot.slane %v265, %v386
      %v388 = vlaneseq
      %v389 = vshrl.u32 %v388, 7
      %v390 = vsub.s32 5, %v389
      %v391 = vrot.slane %v266, %v390
      %v392 = vmul.f32 %v380, %v387
      %v393 = vmul.f32 %v382, %v391
      %v394 = vmul.f32 %v381, %v387
      %v395 = vmul.f32 %v383, %v391
      %396 = vrot.lane.b32.xlu0 %v261, 113
      %v397 = vpop.permute.xlu0 %396
      %398 = vrot.lane.b32.xlu0 %v263, 113
      %v399 = vpop.permute.xlu0 %398
      %400 = vrot.lane.b32.xlu0 %v262, 113
      %v401 = vpop.permute.xlu0 %400
      %402 = vrot.lane.b32.xlu0 %v264, 113
      %v403 = vpop.permute.xlu0 %402
      %vm404 = vcmp.lt.s32.totalorder %v278, 113
      %v405 = vsel %vm404, %v397, %v401
      %v406 = vsel %vm404, %v399, %v403
      %v407 = vsel %vm404, %v401, %v397
      %v408 = vsel %vm404, %v403, %v399
      %v409 = vlaneseq
      %v410 = vshrl.u32 %v409, 7
      %v411 = vsub.s32 6, %v410
      %v412 = vrot.slane %v265, %v411
      %v413 = vlaneseq
      %v414 = vshrl.u32 %v413, 7
      %v415 = vsub.s32 6, %v414
      %v416 = vrot.slane %v266, %v415
      %v417 = vmul.f32 %v405, %v412
      %v418 = vmul.f32 %v407, %v416
      %v419 = vmul.f32 %v406, %v412
      %v420 = vmul.f32 %v408, %v416
      %421 = vrot.lane.b32.xlu0 %v261, 112
      %v422 = vpop.permute.xlu0 %421
      %423 = vrot.lane.b32.xlu0 %v263, 112
      %v424 = vpop.permute.xlu0 %423
      %425 = vrot.lane.b32.xlu0 %v262, 112
      %v426 = vpop.permute.xlu0 %425
      %427 = vrot.lane.b32.xlu0 %v264, 112
      %v428 = vpop.permute.xlu0 %427
      %vm429 = vcmp.lt.s32.totalorder %v278, 112
      %v430 = vsel %vm429, %v422, %v426
      %v431 = vsel %vm429, %v424, %v428
      %v432 = vsel %vm429, %v426, %v422
      %v433 = vsel %vm429, %v428, %v424
      %v434 = vlaneseq
      %v435 = vshrl.u32 %v434, 7
      %v436 = vsub.s32 7, %v435
      %v437 = vrot.slane %v265, %v436
      %v438 = vlaneseq
      %v439 = vshrl.u32 %v438, 7
      %v440 = vsub.s32 7, %v439
      %v441 = vrot.slane %v266, %v440
      %v442 = vmul.f32 %v430, %v437
      %v443 = vmul.f32 %v432, %v441
      %v444 = vmul.f32 %v431, %v437
      %v445 = vmul.f32 %v433, %v441
      %446 = vrot.lane.b32.xlu0 %v261, 111
      %v447 = vpop.permute.xlu0 %446
      %448 = vrot.lane.b32.xlu0 %v263, 111
      %v449 = vpop.permute.xlu0 %448
      %450 = vrot.lane.b32.xlu0 %v262, 111
      %v451 = vpop.permute.xlu0 %450
      %452 = vrot.lane.b32.xlu0 %v264, 111
      %v453 = vpop.permute.xlu0 %452
      %vm454 = vcmp.lt.s32.totalorder %v278, 111
      %v455 = vsel %vm454, %v447, %v451
      %v456 = vsel %vm454, %v449, %v453
      %v457 = vsel %vm454, %v451, %v447
      %v458 = vsel %vm454, %v453, %v449
      %v459 = vlaneseq
      %v460 = vshrl.u32 %v459, 7
      %v461 = vsub.s32 0, %v460
      %v462 = vrot.slane %v267, %v461
      %v463 = vlaneseq
      %v464 = vshrl.u32 %v463, 7
      %v465 = vsub.s32 0, %v464
      %v466 = vrot.slane %v268, %v465
      %v467 = vmul.f32 %v455, %v462
      %v468 = vmul.f32 %v457, %v466
      %v469 = vmul.f32 %v456, %v462
      %v470 = vmul.f32 %v458, %v466
      %v471 = vpack.c.bf16 %v294, %v292
      %v472 = vpack.c.bf16 %v295, %v293
      %v473 = vpack.c.bf16 %v319, %v317
      %v474 = vpack.c.bf16 %v320, %v318
      %v475 = vpack.c.bf16 %v344, %v342
      %v476 = vpack.c.bf16 %v345, %v343
      %v477 = vpack.c.bf16 %v369, %v367
      %v478 = vpack.c.bf16 %v370, %v368
      %v479 = vpack.c.bf16 %v263, %v261
      %v480 = vpack.c.bf16 %v264, %v262
      %v481 = vpack.c.bf16 %v394, %v392
      %v482 = vpack.c.bf16 %v395, %v393
      %v483 = vpack.c.bf16 %v419, %v417
      %v484 = vpack.c.bf16 %v420, %v418
      %v485 = vpack.c.bf16 %v444, %v442
      %v486 = vpack.c.bf16 %v445, %v443
      %v487 = vpack.c.bf16 %v469, %v467
      %v488 = vpack.c.bf16 %v470, %v468
      %v489 = vld [vmem:[%s2] sm:$0xff]
      %v490 = vld [vmem:[%s2 + $0x8] sm:$0xff]
      %v491 = vld [vmem:[%s3] sm:$0xff]
      %v492 = vld [vmem:[%s3 + $0x8] sm:$0xff]
      %494 = vset.pattern.permute.xlu0 0
      %495 = vperm.xlu0 %494, %v491
      %v496 = vpop.permute.xlu0 %495
      %499 = vset.pattern.permute.xlu0 0
      %500 = vperm.xlu0 %499, %v492
      %v501 = vpop.permute.xlu0 %500
      %v505 = vunpack.c.l.b16 %v489
      %v506 = vunpack.c.h.b16 %v489
      %v507 = vunpack.c.l.b16 %v490
      %v508 = vunpack.c.h.b16 %v490
      %v509 = vpack.c.b16 %v507, %v505
      %v510 = vpack.c.b16 %v508, %v506
      %vm512 = vcmask 130048
      %v514 = vsel %vm512, %v510, 0
      %516 = vmatprep.subr.bf16.mxu0 %v486
      %517 = vmatpush1.bf16.msra.mxu0 %v485
      %518 = vmatprep.subr.bf16.mxu0 %v484
      %519 = vmatpush1.bf16.msra.mxu0 %v483
      %520 = vmatprep.subr.bf16.mxu0 %v482
      %521 = vmatpush1.bf16.msra.mxu0 %v481
      %522 = vmatprep.subr.bf16.mxu0 %v480
      %523 = vmatpush1.bf16.msra.mxu0 %v479
      %524 = vmatprep.subr.bf16.mxu0 %v478
      %525 = vmatpush1.bf16.msra.mxu0 %v477
      %526 = vmatprep.subr.bf16.mxu0 %v476
      %527 = vmatpush1.bf16.msra.mxu0 %v475
      %528 = vmatprep.subr.bf16.mxu0 %v474
      %529 = vmatpush1.bf16.msra.mxu0 %v473
      %530 = vmatprep.subr.bf16.mxu0 %v472
      %531 = vmatpush1.bf16.msra.mxu0 %v471
      %532 = vmatprep.subr.bf16.mxu0 0
      %533 = vmatpush2.bf16.msra.mxu0 0
      %534 = vmatprep.subr.bf16.mxu0 0
      %535 = vmatpush2.bf16.msra.mxu0 0
      %536 = vmatprep.subr.bf16.mxu0 0
      %537 = vmatpush2.bf16.msra.mxu0 0
      %538 = vmatprep.subr.bf16.mxu0 0
      %539 = vmatpush2.bf16.msra.mxu0 0
      %540 = vmatprep.subr.bf16.mxu0 0
      %541 = vmatpush2.bf16.msra.mxu0 0
      %542 = vmatprep.subr.bf16.mxu0 0
      %543 = vmatpush2.bf16.msra.mxu0 0
      %544 = vmatprep.subr.bf16.mxu0 0
      %545 = vmatpush2.bf16.msra.mxu0 0
      %546 = vmatprep.subr.bf16.mxu0 %v488
      %547 = vmatpush2.bf16.msra.mxu0 %v487
      %548 = vmatprep.mubr.bf16.mxu0 %v514
      %549 = vmatmul.mubr.bf16.gmra.mxu0 %v509
      %v550 = vpop.f32.mrf.mxu0
      %v551 = vadd.f32 %v496, %v550
      %v552 = vpop.f32.mrf.mxu0
      %v553 = vadd.f32 %v496, %v552
      %v554 = vpop.f32.mrf.mxu0
      %v555 = vadd.f32 %v501, %v554
      %v556 = vpop.f32.mrf.mxu0
      %v557 = vadd.f32 %v501, %v556
      %558 = vdwg.mxu0
      %v559 = vmax.f32 %v551, 0.0
      %v560 = vmax.f32 %v553, 0.0
      %v561 = vmax.f32 %v555, 0.0
      %v562 = vmax.f32 %v557, 0.0
      %563 = vrot.lane.b32.xlu0 %v559, 17
      %v564 = vpop.permute.xlu0 %563
      %565 = vrot.lane.b32.xlu0 %v561, 17
      %v566 = vpop.permute.xlu0 %565
      %567 = vrot.lane.b32.xlu0 %v560, 17
      %v568 = vpop.permute.xlu0 %567
      %569 = vrot.lane.b32.xlu0 %v562, 17
      %v570 = vpop.permute.xlu0 %569
      %v571 = vsel %vm279, %v564, %v568
      %v572 = vsel %vm279, %v566, %v570
      %v573 = vsel %vm279, %v568, %v564
      %v574 = vsel %vm279, %v570, %v566
      %v575 = vmul.f32 %v573, %v287
      %v576 = vmul.f32 %v571, %v291
      %v577 = vmul.f32 %v574, %v287
      %v578 = vmul.f32 %v572, %v291
      %579 = vrot.lane.b32.xlu0 %v559, 16
      %v580 = vpop.permute.xlu0 %579
      %581 = vrot.lane.b32.xlu0 %v561, 16
      %v582 = vpop.permute.xlu0 %581
      %583 = vrot.lane.b32.xlu0 %v560, 16
      %v584 = vpop.permute.xlu0 %583
      %585 = vrot.lane.b32.xlu0 %v562, 16
      %v586 = vpop.permute.xlu0 %585
      %v587 = vsel %vm304, %v580, %v584
      %v588 = vsel %vm304, %v582, %v586
      %v589 = vsel %vm304, %v584, %v580
      %v590 = vsel %vm304, %v586, %v582
      %v591 = vmul.f32 %v589, %v312
      %v592 = vmul.f32 %v587, %v316
      %v593 = vmul.f32 %v590, %v312
      %v594 = vmul.f32 %v588, %v316
      %595 = vrot.lane.b32.xlu0 %v559, 15
      %v596 = vpop.permute.xlu0 %595
      %597 = vrot.lane.b32.xlu0 %v561, 15
      %v598 = vpop.permute.xlu0 %597
      %599 = vrot.lane.b32.xlu0 %v560, 15
      %v600 = vpop.permute.xlu0 %599
      %601 = vrot.lane.b32.xlu0 %v562, 15
      %v602 = vpop.permute.xlu0 %601
      %v603 = vsel %vm329, %v596, %v600
      %v604 = vsel %vm329, %v598, %v602
      %v605 = vsel %vm329, %v600, %v596
      %v606 = vsel %vm329, %v602, %v598
      %v607 = vmul.f32 %v605, %v337
      %v608 = vmul.f32 %v603, %v341
      %v609 = vmul.f32 %v606, %v337
      %v610 = vmul.f32 %v604, %v341
      %611 = vrot.lane.b32.xlu0 %v559, 1
      %v612 = vpop.permute.xlu0 %611
      %613 = vrot.lane.b32.xlu0 %v561, 1
      %v614 = vpop.permute.xlu0 %613
      %615 = vrot.lane.b32.xlu0 %v560, 1
      %v616 = vpop.permute.xlu0 %615
      %617 = vrot.lane.b32.xlu0 %v562, 1
      %v618 = vpop.permute.xlu0 %617
      %v619 = vsel %vm354, %v612, %v616
      %v620 = vsel %vm354, %v614, %v618
      %v621 = vsel %vm354, %v616, %v612
      %v622 = vsel %vm354, %v618, %v614
      %v623 = vmul.f32 %v621, %v362
      %v624 = vmul.f32 %v619, %v366
      %v625 = vmul.f32 %v622, %v362
      %v626 = vmul.f32 %v620, %v366
      %627 = vrot.lane.b32.xlu0 %v559, 127
      %v628 = vpop.permute.xlu0 %627
      %629 = vrot.lane.b32.xlu0 %v561, 127
      %v630 = vpop.permute.xlu0 %629
      %631 = vrot.lane.b32.xlu0 %v560, 127
      %v632 = vpop.permute.xlu0 %631
      %633 = vrot.lane.b32.xlu0 %v562, 127
      %v634 = vpop.permute.xlu0 %633
      %v635 = vsel %vm379, %v628, %v632
      %v636 = vsel %vm379, %v630, %v634
      %v637 = vsel %vm379, %v632, %v628
      %v638 = vsel %vm379, %v634, %v630
      %v639 = vmul.f32 %v635, %v387
      %v640 = vmul.f32 %v637, %v391
      %v641 = vmul.f32 %v636, %v387
      %v642 = vmul.f32 %v638, %v391
      %643 = vrot.lane.b32.xlu0 %v559, 113
      %v644 = vpop.permute.xlu0 %643
      %645 = vrot.lane.b32.xlu0 %v561, 113
      %v646 = vpop.permute.xlu0 %645
      %647 = vrot.lane.b32.xlu0 %v560, 113
      %v648 = vpop.permute.xlu0 %647
      %649 = vrot.lane.b32.xlu0 %v562, 113
      %v650 = vpop.permute.xlu0 %649
      %v651 = vsel %vm404, %v644, %v648
      %v652 = vsel %vm404, %v646, %v650
      %v653 = vsel %vm404, %v648, %v644
      %v654 = vsel %vm404, %v650, %v646
      %v655 = vmul.f32 %v651, %v412
      %v656 = vmul.f32 %v653, %v416
      %v657 = vmul.f32 %v652, %v412
      %v658 = vmul.f32 %v654, %v416
      %659 = vrot.lane.b32.xlu0 %v559, 112
      %v660 = vpop.permute.xlu0 %659
      %661 = vrot.lane.b32.xlu0 %v561, 112
      %v662 = vpop.permute.xlu0 %661
      %663 = vrot.lane.b32.xlu0 %v560, 112
      %v664 = vpop.permute.xlu0 %663
      %665 = vrot.lane.b32.xlu0 %v562, 112
      %v666 = vpop.permute.xlu0 %665
      %v667 = vsel %vm429, %v660, %v664
      %v668 = vsel %vm429, %v662, %v666
      %v669 = vsel %vm429, %v664, %v660
      %v670 = vsel %vm429, %v666, %v662
      %v671 = vmul.f32 %v667, %v437
      %v672 = vmul.f32 %v669, %v441
      %v673 = vmul.f32 %v668, %v437
      %v674 = vmul.f32 %v670, %v441
      %675 = vrot.lane.b32.xlu0 %v559, 111
      %v676 = vpop.permute.xlu0 %675
      %677 = vrot.lane.b32.xlu0 %v561, 111
      %v678 = vpop.permute.xlu0 %677
      %679 = vrot.lane.b32.xlu0 %v560, 111
      %v680 = vpop.permute.xlu0 %679
      %681 = vrot.lane.b32.xlu0 %v562, 111
      %v682 = vpop.permute.xlu0 %681
      %v683 = vsel %vm454, %v676, %v680
      %v684 = vsel %vm454, %v678, %v682
      %v685 = vsel %vm454, %v680, %v676
      %v686 = vsel %vm454, %v682, %v678
      %v687 = vmul.f32 %v683, %v462
      %v688 = vmul.f32 %v685, %v466
      %v689 = vmul.f32 %v684, %v462
      %v690 = vmul.f32 %v686, %v466
      %v691 = vpack.c.bf16 %v577, %v575
      %v692 = vpack.c.bf16 %v578, %v576
      %v693 = vpack.c.bf16 %v593, %v591
      %v694 = vpack.c.bf16 %v594, %v592
      %v695 = vpack.c.bf16 %v609, %v607
      %v696 = vpack.c.bf16 %v610, %v608
      %v697 = vpack.c.bf16 %v625, %v623
      %v698 = vpack.c.bf16 %v626, %v624
      %v699 = vpack.c.bf16 %v561, %v559
      %v700 = vpack.c.bf16 %v562, %v560
      %v701 = vpack.c.bf16 %v641, %v639
      %v702 = vpack.c.bf16 %v642, %v640
      %v703 = vpack.c.bf16 %v657, %v655
      %v704 = vpack.c.bf16 %v658, %v656
      %v705 = vpack.c.bf16 %v673, %v671
      %v706 = vpack.c.bf16 %v674, %v672
      %v707 = vpack.c.bf16 %v689, %v687
      %v708 = vpack.c.bf16 %v690, %v688
      %v709 = vld [vmem:[%s4] sm:$0xff]
      %v710 = vld [vmem:[%s4 + $0x8] sm:$0xff]
      %v711 = vld [vmem:[%s5] sm:$0xff]
      %v712 = vld [vmem:[%s5 + $0x8] sm:$0xff]
      %714 = vset.pattern.permute.xlu0 0
      %715 = vperm.xlu0 %714, %v711
      %v716 = vpop.permute.xlu0 %715
      %719 = vset.pattern.permute.xlu0 0
      %720 = vperm.xlu0 %719, %v712
      %v721 = vpop.permute.xlu0 %720
      %v725 = vunpack.c.l.b16 %v709
      %v726 = vunpack.c.h.b16 %v709
      %v727 = vunpack.c.l.b16 %v710
      %v728 = vunpack.c.h.b16 %v710
      %v729 = vpack.c.b16 %v727, %v725
      %v730 = vpack.c.b16 %v728, %v726
      %v733 = vsel %vm512, %v730, 0
      %735 = vmatprep.subr.bf16.mxu0 %v706
      %736 = vmatpush1.bf16.msra.mxu0 %v705
      %737 = vmatprep.subr.bf16.mxu0 %v704
      %738 = vmatpush1.bf16.msra.mxu0 %v703
      %739 = vmatprep.subr.bf16.mxu0 %v702
      %740 = vmatpush1.bf16.msra.mxu0 %v701
      %741 = vmatprep.subr.bf16.mxu0 %v700
      %742 = vmatpush1.bf16.msra.mxu0 %v699
      %743 = vmatprep.subr.bf16.mxu0 %v698
      %744 = vmatpush1.bf16.msra.mxu0 %v697
      %745 = vmatprep.subr.bf16.mxu0 %v696
      %746 = vmatpush1.bf16.msra.mxu0 %v695
      %747 = vmatprep.subr.bf16.mxu0 %v694
      %748 = vmatpush1.bf16.msra.mxu0 %v693
      %749 = vmatprep.subr.bf16.mxu0 %v692
      %750 = vmatpush1.bf16.msra.mxu0 %v691
      %751 = vmatprep.subr.bf16.mxu0 0
      %752 = vmatpush2.bf16.msra.mxu0 0
      %753 = vmatprep.subr.bf16.mxu0 0
      %754 = vmatpush2.bf16.msra.mxu0 0
      %755 = vmatprep.subr.bf16.mxu0 0
      %756 = vmatpush2.bf16.msra.mxu0 0
      %757 = vmatprep.subr.bf16.mxu0 0
      %758 = vmatpush2.bf16.msra.mxu0 0
      %759 = vmatprep.subr.bf16.mxu0 0
      %760 = vmatpush2.bf16.msra.mxu0 0
      %761 = vmatprep.subr.bf16.mxu0 0
      %762 = vmatpush2.bf16.msra.mxu0 0
      %763 = vmatprep.subr.bf16.mxu0 0
      %764 = vmatpush2.bf16.msra.mxu0 0
      %765 = vmatprep.subr.bf16.mxu0 %v708
      %766 = vmatpush2.bf16.msra.mxu0 %v707
      %767 = vmatprep.mubr.bf16.mxu0 %v733
      %768 = vmatmul.mubr.bf16.gmra.mxu0 %v729
      %v769 = vpop.f32.mrf.mxu0
      %v770 = vadd.f32 %v716, %v769
      %v771 = vpop.f32.mrf.mxu0
      %v772 = vadd.f32 %v716, %v771
      %v773 = vpop.f32.mrf.mxu0
      %v774 = vadd.f32 %v721, %v773
      %v775 = vpop.f32.mrf.mxu0
      %v776 = vadd.f32 %v721, %v775
      %777 = vdwg.mxu0
      %v778 = vadd.f32 %v770, %v261
      %v779 = vadd.f32 %v772, %v262
      %v780 = vadd.f32 %v774, %v263
      %v781 = vadd.f32 %v776, %v264
      %782 = vst [vmem:[%s258] sm:$0xff] %v778
      %783 = vst [vmem:[%s258 + $0x8] sm:$0xff] %v779
      %784 = vst [vmem:[%s258 + $0x10] sm:$0xff] %v780
      %785 = vst [vmem:[%s258 + $0x18] sm:$0xff] %v781
      %s786 = smul.u32 2, %s17
      %p787 = scmp.lt.s32.totalorder %s786, 3
      %s788 = scalar_select %p787, %s786, 3
      %s789 = smul.addr %s788, 2
      %s790 = smul.addr %s789, 8
      %s791 = scalar_lea.vmem %s6, %s790
      // Predicated region
      $region45: #{resblock_forward.1} parent=43 // pred_check
        %p792 = pneg %p166
      $region46: #{resblock_forward.1} parent=43 // pred_check_branch
        %794 = sbr.rel (%p792) target = $region48
      $region47: #{resblock_forward.1} parent=43 // pred_region
        %s795 = smul.u32 2, %s17
      $region48: #{resblock_forward.1} parent=43 // pred_fallthru
        _
    $region44: #{resblock_forward.1} parent=5 // pred_fallthru
      _
    %p796 = scmp.le.s32.totalorder 2, %s12
    // Predicated region
    $region49: #{resblock_forward.1} parent=5 // pred_check
      %p797 = pneg %p796
    $region50: #{resblock_forward.1} parent=5 // pred_check_branch
      %799 = sbr.rel (%p797) target = $region52
    $region51: #{resblock_forward.1} parent=5 // pred_region
      %s800 = ssub.s32 %s12, 2
      // Predicated region
      $region53: #{resblock_forward.1} parent=51 // pred_check
        %p801 = pneg %p172
      $region54: #{resblock_forward.1} parent=51 // pred_check_branch
        %803 = sbr.rel (%p801) target = $region56
      $region55: #{resblock_forward.1} parent=51 // pred_region
        %s804 = smul.u32 2, %s18
        %p805 = scmp.lt.s32.totalorder %s804, 3
        %s806 = scalar_select %p805, %s804, 3
        %s807 = smul.addr %s806, 2
        %s808 = smul.addr %s807, 8
        %s809 = scalar_lea.vmem %s6, %s808
      $region56: #{resblock_forward.1} parent=51 // pred_fallthru
        _
    $region52: #{resblock_forward.1} parent=5 // pred_fallthru
      _
  $region6: #{resblock_forward.1} parent=0 // loop_footer
    %s16 = sadd.s32 1, %s12
  $region7: #{resblock_forward.1} parent=0 // loop_footer_branch
    %11 = sbr.rel target = $region3
  $region8: #{resblock_forward.1} parent=0 // loop_exit
    _

</llo_original>
